<compile_context>
chip_gen: v5e
topology: v5e:2x2
jax: 0.10.0
libtpu: 0.0.40
codegen_flags: <defaults>
</compile_context>

<pallas_src>
import functools

import jax
import jax.numpy as jnp
from jax.experimental import pallas as pl
from jax.experimental.pallas import tpu as pltpu


_LANES = 128
# (rows, 128) f32 tile = rows * 512 B.  2048 rows -> 1 MiB per tile; with two
# inputs double-buffered that's ~4 MiB VMEM (plenty of headroom on every gen).
_DEFAULT_MAX_BLOCK_ROWS = 2048


def _round_up(x, m):
    return ((x + m - 1) // m) * m


def _bce_sum_kernel(pred_ref, tgt_ref, out_ref, acc_ref, *, inv_n):
    step = pl.program_id(0)

    @pl.when(step == 0)
    def _init():
        acc_ref[0] = jnp.float32(0.0)

    x = pred_ref[...].astype(jnp.float32)
    t = tgt_ref[...].astype(jnp.float32)

    # PyTorch: BCELoss(sigmoid(x), t); log terms clamped at -100 for safety.
    p = jax.nn.sigmoid(x)                                # EUP
    log_p = jnp.maximum(jnp.log(p), -100.0)              # EUP + VPU
    log_1mp = jnp.maximum(jnp.log1p(-p), -100.0)         # EUP + VPU
    bce = -(t * log_p + (1.0 - t) * log_1mp)             # VPU

    # Two-stage reduce: lane reduce (XLU) then sublane reduce + scalar accumulate.
    lane_sums = jnp.sum(bce, axis=-1, keepdims=True)     # (block_rows, 1)
    acc_ref[0] += jnp.sum(lane_sums)

    @pl.when(step == pl.num_programs(0) - 1)
    def _finalize():
        out_ref[0, 0] = acc_ref[0] * jnp.float32(inv_n)


@functools.partial(jax.jit, static_argnames=("max_block_rows",))
def available_lane_loss(predictions, target, *,
                        max_block_rows=_DEFAULT_MAX_BLOCK_ROWS):
    """left_bce_mean + right_bce_mean == sum(BCE over all elems) / (N/2)."""
    assert predictions.shape == target.shape
    assert predictions.shape[-1] == 2, "last dim must be (left, right)"

    n = predictions.size
    n_per_channel = n // 2

    # Lane-dense layout: flatten to (rows, 128); pad the tail with elements
    # whose BCE is exactly 0 (x=+50 -> sigmoid==1.0 in f32, t=1).
    min_rows = _round_up(pl.cdiv(n, _LANES), 8)
    block_rows = min(max_block_rows, min_rows)
    rows = _round_up(min_rows, block_rows)
    padded = rows * _LANES
    pad = padded - n

    flat_p = predictions.reshape(-1)
    flat_t = target.reshape(-1)
    if pad:
        flat_p = jnp.pad(flat_p, (0, pad), constant_values=50.0)
        flat_t = jnp.pad(flat_t, (0, pad), constant_values=1.0)
    pred2d = flat_p.reshape(rows, _LANES)
    tgt2d = flat_t.reshape(rows, _LANES)

    grid = (rows // block_rows,)
    itemsize = jnp.dtype(predictions.dtype).itemsize

    kernel = functools.partial(_bce_sum_kernel,
                               inv_n=1.0 / float(n_per_channel))

    out = pl.pallas_call(
        kernel,
        out_shape=jax.ShapeDtypeStruct((1, 1), jnp.float32),
        grid_spec=pltpu.PrefetchScalarGridSpec(
            num_scalar_prefetch=0,
            grid=grid,
            in_specs=[
                pl.BlockSpec((block_rows, _LANES), lambda i: (i, 0)),
                pl.BlockSpec((block_rows, _LANES), lambda i: (i, 0)),
            ],
            out_specs=pl.BlockSpec(memory_space=pltpu.MemorySpace.SMEM),
            scratch_shapes=[pltpu.SMEM((1,), jnp.float32)],
        ),
        compiler_params=pltpu.CompilerParams(
            # Single reduction axis with a resident SMEM accumulator.
            dimension_semantics=("arbitrary",),
        ),
        cost_estimate=pl.CostEstimate(
            flops=8 * padded,
            transcendentals=3 * padded,
            bytes_accessed=2 * padded * itemsize + 4,
        ),
    )(pred2d, tgt2d)
    return out[0, 0]


def _reference(predictions, target):
    # Pure-JAX mirror of torch.nn.BCELoss(sigmoid(x), t), mean reduction,
    # log terms clamped at -100, applied per channel.
    p = jax.nn.sigmoid(predictions.astype(jnp.float32))
    t = target.astype(jnp.float32)

    def bce(prob, tt):
        log_p = jnp.maximum(jnp.log(prob), -100.0)
        log_1mp = jnp.maximum(jnp.log1p(-prob), -100.0)
        return -jnp.mean(tt * log_p + (1.0 - tt) * log_1mp)

    return bce(p[..., 0:1], t[..., 0:1]) + bce(p[..., 1:2], t[..., 1:2])


if __name__ == "__main__":
    key = jax.random.PRNGKey(0)
    k1, k2, k3, k4 = jax.random.split(key, 4)

    # Small shape matching the module's [..., 2] (left, right) convention.
    B, S, C = 2, 8, 2
    pred_small = jax.random.normal(k1, (B, S, C), dtype=jnp.float32)
    tgt_small = (jax.random.uniform(k2, (B, S, C)) > 0.5).astype(jnp.float32)

    loss = jax.block_until_ready(available_lane_loss(pred_small, tgt_small))
    ref = _reference(pred_small, tgt_small)
    assert jnp.allclose(loss, ref, atol=1e-5, rtol=1e-5), (loss, ref)

    # Moderate shape exercising tail padding + a multi-step grid (8 tiles),
    # with large logits to hit the -100 clamp / f32 saturation path.
    B2, S2 = 2, 4093
    pred_big = 20.0 * jax.random.normal(k3, (B2, S2, C), dtype=jnp.float32)
    tgt_big = (jax.random.uniform(k4, (B2, S2, C)) > 0.5).astype(jnp.float32)

    loss_big = jax.block_until_ready(
        available_lane_loss(pred_big, tgt_big, max_block_rows=16))
    ref_big = _reference(pred_big, tgt_big)
    assert jnp.allclose(loss_big, ref_big, atol=1e-4, rtol=1e-5), (loss_big, ref_big)

    print("KERNEL_OK")
</pallas_src>

<mosaic_0001>
module attributes {stable_mosaic.version = 11 : i64} {
  func.func @_bce_sum_kernel(%arg0: i32, %arg1: memref<8x128xf32, #tpu.memory_space<vmem>>, %arg2: memref<8x128xf32, #tpu.memory_space<vmem>>, %arg3: memref<1x1xf32, #tpu.memory_space<smem>>, %arg4: memref<1xf32, #tpu.memory_space<smem>>) attributes {dimension_semantics = [#tpu.dimension_semantics<arbitrary>], iteration_bounds = array<i64: 1>, scalar_prefetch = 0 : i64, scratch_operands = 1 : i64, tpu.core_type = #tpu.core_type<tc>, window_params = [{transform_indices = @transform_0, window_bounds = array<i64: 8, 128>}, {transform_indices = @transform_1, window_bounds = array<i64: 8, 128>}, {transform_indices = @transform_2, window_bounds = array<i64: 1, 1>}]} {
    %c0_i32 = arith.constant 0 : i32
    %0 = arith.cmpi eq, %arg0, %c0_i32 : i32
    %1 = arith.extui %0 : i1 to i32
    %c0_i32_0 = arith.constant 0 : i32
    %2 = arith.cmpi ne, %1, %c0_i32_0 : i32
    scf.if %2 {
      %cst_15 = arith.constant 0.000000e+00 : f32
      %c0_16 = arith.constant 0 : index
      %37 = memref.load %arg4[%c0_16] : memref<1xf32, #tpu.memory_space<smem>>
      memref.store %cst_15, %arg4[%c0_16] : memref<1xf32, #tpu.memory_space<smem>>
    } else {
    }
    %c0 = arith.constant 0 : index
    %c0_1 = arith.constant 0 : index
    %3 = vector.load %arg1[%c0, %c0_1] : memref<8x128xf32, #tpu.memory_space<vmem>>, vector<8x128xf32>
    %c0_2 = arith.constant 0 : index
    %c0_3 = arith.constant 0 : index
    %4 = vector.load %arg2[%c0_2, %c0_3] : memref<8x128xf32, #tpu.memory_space<vmem>>, vector<8x128xf32>
    %5 = arith.negf %3 : vector<8x128xf32>
    %6 = math.exp %5 : vector<8x128xf32>
    %cst = arith.constant 1.000000e+00 : f32
    %7 = vector.broadcast %cst : f32 to vector<8x128xf32>
    %8 = arith.addf %7, %6 : vector<8x128xf32>
    %9 = arith.divf %7, %8 : vector<8x128xf32>
    %10 = math.log %9 : vector<8x128xf32>
    %cst_4 = arith.constant -1.000000e+02 : f32
    %11 = vector.broadcast %cst_4 : f32 to vector<8x128xf32>
    %12 = arith.maximumf %10, %11 : vector<8x128xf32>
    %cst_5 = arith.constant 0.000000e+00 : f32
    %13 = vector.broadcast %cst_5 : f32 to vector<8x128xf32>
    %14 = arith.subf %13, %9 : vector<8x128xf32>
    %15 = math.log1p %14 : vector<8x128xf32>
    %cst_6 = arith.constant -1.000000e+02 : f32
    %16 = vector.broadcast %cst_6 : f32 to vector<8x128xf32>
    %17 = arith.maximumf %15, %16 : vector<8x128xf32>
    %18 = arith.mulf %4, %12 : vector<8x128xf32>
    %cst_7 = arith.constant 1.000000e+00 : f32
    %19 = vector.broadcast %cst_7 : f32 to vector<8x128xf32>
    %20 = arith.subf %19, %4 : vector<8x128xf32>
    %21 = arith.mulf %20, %17 : vector<8x128xf32>
    %22 = arith.addf %18, %21 : vector<8x128xf32>
    %cst_8 = arith.constant 0.000000e+00 : f32
    %23 = vector.broadcast %cst_8 : f32 to vector<8x128xf32>
    %24 = arith.subf %23, %22 : vector<8x128xf32>
    %cst_9 = arith.constant dense<0.000000e+00> : vector<8xf32>
    %25 = vector.multi_reduction <add>, %24, %cst_9 [1] : vector<8x128xf32> to vector<8xf32>
    %26 = vector.shape_cast %25 : vector<8xf32> to vector<8x1xf32>
    %c0_10 = arith.constant 0 : index
    %27 = memref.load %arg4[%c0_10] : memref<1xf32, #tpu.memory_space<smem>>
    %28 = vector.shape_cast %26 : vector<8x1xf32> to vector<1x8x1xf32>
    %cst_11 = arith.constant dense<0.000000e+00> : vector<1xf32>
    %29 = vector.multi_reduction <add>, %28, %cst_11 [1, 2] : vector<1x8x1xf32> to vector<1xf32>
    %30 = vector.shape_cast %29 : vector<1xf32> to vector<1x1x1xf32>
    %31 = vector.extract %30[0, 0, 0] : f32 from vector<1x1x1xf32>
    %32 = arith.addf %27, %31 : f32
    %c0_12 = arith.constant 0 : index
    %33 = memref.load %arg4[%c0_12] : memref<1xf32, #tpu.memory_space<smem>>
    memref.store %32, %arg4[%c0_12] : memref<1xf32, #tpu.memory_space<smem>>
    %c0_i32_13 = arith.constant 0 : i32
    %34 = arith.cmpi eq, %arg0, %c0_i32_13 : i32
    %35 = arith.extui %34 : i1 to i32
    %c0_i32_14 = arith.constant 0 : i32
    %36 = arith.cmpi ne, %35, %c0_i32_14 : i32
    scf.if %36 {
      %c0_15 = arith.constant 0 : index
      %37 = memref.load %arg4[%c0_15] : memref<1xf32, #tpu.memory_space<smem>>
      %cst_16 = arith.constant 6.250000e-02 : f32
      %38 = arith.mulf %37, %cst_16 : f32
      %c0_17 = arith.constant 0 : index
      %c0_18 = arith.constant 0 : index
      %39 = memref.load %arg3[%c0_17, %c0_18] : memref<1x1xf32, #tpu.memory_space<smem>>
      memref.store %38, %arg3[%c0_17, %c0_18] : memref<1x1xf32, #tpu.memory_space<smem>>
    } else {
    }
    return
  }
  func.func @transform_0(%arg0: i32) -> (i32, i32) {
    %c0_i32 = arith.constant 0 : i32
    %c0_i32_0 = arith.constant 0 : i32
    return %arg0, %c0_i32 : i32, i32
  }
  func.func @transform_1(%arg0: i32) -> (i32, i32) {
    %c0_i32 = arith.constant 0 : i32
    %c0_i32_0 = arith.constant 0 : i32
    return %arg0, %c0_i32 : i32, i32
  }
  func.func @transform_2(%arg0: i32) -> (i32, i32) {
    %c0_i32 = arith.constant 0 : i32
    %c0_i32_0 = arith.constant 0 : i32
    %c0_i32_1 = arith.constant 0 : i32
    return %c0_i32, %c0_i32_0 : i32, i32
  }
}

</mosaic_0001>

<llo_original>
// kernel: available_lane_loss.1
$region0: #{available_lane_loss.1}
  #allocation0 [shape = 'u32[]', space=smem, size = 0x4, offset = 0x4, fixed_abs, tag = 'smem constant byte address 0x4 - core index']
  #allocation1 [shape = 'u32[72,128]{1,0:T(1,128)}', space=vmem, size = 0x9000, scoped, tag = 'internal scratch']
  #allocation2 [shape = 'f32[1]{0:T(128)}', space=smem, size = 0x200, scoped, tag = 'scratch operand']
  %s0 = inlined_call_operand.vmem [shape: f32[8,128], index: 0, kind: input, shape index: {}]
  %s1 = inlined_call_operand.vmem [shape: f32[8,128], index: 1, kind: input, shape index: {}]
  %s2 = inlined_call_operand.hbm [shape: f32[1,1], index: 2, kind: output, shape index: {}]
  %s3 = sld [smem:[#allocation0]]
  $region26: #{available_lane_loss.1} parent=0
    _
  %s5 = ssub.s32 1, %s3
  %s6 = scalar_select 0, %s5, %s3
  $region1: #{available_lane_loss.1} parent=0
    #allocation3 [shape = 'u8[512]{0}', space=smem, size = 0x200, scoped, tag = 'output window, operand 0, single buffered']
    #allocation4 [shape = 's32[1]{0}', space=sflag, size = 0x4, scoped, tag = 'scoped memory for available_lane_loss.1']
    %7 = vsyncpa [#allocation4], 0
    // Predicated region
    $region2: #{available_lane_loss.1} parent=1 // pred_check
      _
    $region3: #{available_lane_loss.1} parent=1 // pred_check_branch
      %9 = sbr.rel (0) target = $region5
    $region4: #{available_lane_loss.1} parent=1 // pred_region
      _
    $region5: #{available_lane_loss.1} parent=1 // pred_fallthru
      _
    // Predicated region
    $region6: #{available_lane_loss.1} parent=1 // pred_check
      _
    $region7: #{available_lane_loss.1} parent=1 // pred_check_branch
      %11 = sbr.rel (0) target = $region9
    $region8: #{available_lane_loss.1} parent=1 // pred_region
      _
    $region9: #{available_lane_loss.1} parent=1 // pred_fallthru
      _
    %p12 = scmp.eq.s32.totalorder 0, 0
    // Predicated region
    $region10: #{available_lane_loss.1} parent=1 // pred_check
      %p13 = pneg %p12
    $region11: #{available_lane_loss.1} parent=1 // pred_check_branch
      %15 = sbr.rel (%p13) target = $region13
    $region12: #{available_lane_loss.1} parent=1 // pred_region
      %s16 = scalar_lea.smem [#allocation2], 0
      %17 = sst [smem:[%s16]] 0.0
    $region13: #{available_lane_loss.1} parent=1 // pred_fallthru
      _
    %v18 = vld [vmem:[%s0] sm:$0xff]
    %v19 = vld [vmem:[%s1] sm:$0xff]
    %v20 = vxor.u32 %v18, 2147483648
    %v21 = vmul.f32 %v20, 1.442695
    %v22 = vpow.pop %v21
    %v23 = vadd.f32 %v22, 1.0
    %v24 = vrcp.pop %v23
    %v25 = vmul.f32 %v23, %v24
    %v26 = vsub.f32 1.0, %v25
    %v27 = vmul.f32 %v24, %v26
    %v28 = vadd.f32 %v24, %v27
    %vm29 = vweird.f32 %v23
    %vm30 = vweird.f32 %v24
    %vm31 = vmor %vm29, %vm30
    %v32 = vsel %vm31, %v24, %v28
    %v33 = vand.u32 2147483647, %v23
    %vm34 = vcmp.eq.f32.partialorder %v33, 8.507059e+37
    %v35 = vand.u32 %v23, 2147483648
    %v36 = vor.u32 1.1754944e-38, %v35
    %v37 = vsel %vm34, %v36, %v32
    %v38 = vmul.f32 1.0, %v37
    %v39 = vlog2.pop %v38
    %v40 = vmul.f32 %v39, 0.6931472
    %v41 = vmax.f32 %v40, -100.0
    %v42 = vsub.f32 0.0, %v38
    %v43 = vadd.f32 %v42, 1.0
    %v44 = vlog2.pop %v43
    %v45 = vmul.f32 %v44, 0.6931472
    %v46 = vmul.f32 -0.5, %v42
    %v47 = vadd.f32 %v46, 1.0
    %v48 = vmul.f32 %v47, %v42
    %v49 = vand.u32 2147483647, %v42
    %vm50 = vcmp.lt.f32.partialorder %v49, 0.0004427343
    %v51 = vsel %vm50, %v48, %v45
    %v52 = vmax.f32 %v51, -100.0
    %v53 = vmul.f32 %v19, %v41
    %v54 = vsub.f32 1.0, %v19
    %v55 = vmul.f32 %v54, %v52
    %v56 = vadd.f32 %v53, %v55
    %v57 = vsub.f32 0.0, %v56
    %58 = vadd.xlane.f32.xlu0 %v57
    %v59 = vpop.xlane.xlu0 %58
    %s60 = sld [smem:[#allocation2]]
    %vm61 = vcmask 7168
    %v62 = vsel %vm61, %v59, 0.0
    %63 = vadd.xlane.f32.xlu0 %v62
    %v64 = vpop.xlane.xlu0 %63
    %v65 = vrot.slane %v64, 4
    %v66 = vadd.f32 %v64, %v65
    %v67 = vrot.slane %v66, 2
    %v68 = vadd.f32 %v66, %v67
    %v69 = vrot.slane %v68, 1
    %v70 = vadd.f32 %v68, %v69
    %s71 = vtos %v70
    %s72 = sadd.f32 %s60, %s71
    %s73 = scalar_lea.smem [#allocation2], 0
    %74 = sst [smem:[%s73]] %s72
    // Predicated region
    $region14: #{available_lane_loss.1} parent=1 // pred_check
      %p75 = pneg %p12
    $region15: #{available_lane_loss.1} parent=1 // pred_check_branch
      %77 = sbr.rel (%p75) target = $region17
    $region16: #{available_lane_loss.1} parent=1 // pred_region
      %s78 = sld [smem:[#allocation2]]
      %s79 = smul.f32 %s78, 0.0625
      %s80 = scalar_lea.smem [#allocation3], 0
      %81 = sst [smem:[%s80]] %s79
    $region17: #{available_lane_loss.1} parent=1 // pred_fallthru
      _
    // Predicated region
    $region18: #{available_lane_loss.1} parent=1 // pred_check
      _
    $region19: #{available_lane_loss.1} parent=1 // pred_check_branch
      %83 = sbr.rel (0) target = $region21
    $region20: #{available_lane_loss.1} parent=1 // pred_region
      %85 = vsyncadd [#allocation4], 0
      %s87 = sshll.u32 %s2, 4
      %s88 = int_to_ptr.hbm [resolvable:$true] %s87
      %90 = dma.smem_to_hbm [#allocation3], 16, %s88, [#allocation4]
    $region21: #{available_lane_loss.1} parent=1 // pred_fallthru
      _
    // Predicated region
    $region22: #{available_lane_loss.1} parent=1 // pred_check
      _
    $region23: #{available_lane_loss.1} parent=1 // pred_check_branch
      %92 = sbr.rel (0) target = $region25
    $region24: #{available_lane_loss.1} parent=1 // pred_region
      %94 = dma.done [#allocation4], 16
    $region25: #{available_lane_loss.1} parent=1 // pred_fallthru
      _
    %95 = sfence
    %96 = vsyncpa [#allocation4], 1

</llo_original>
